<compile_context>
chip_gen: v7x
topology: tpu7x:2x2x1
jax: 0.10.0
libtpu: 0.0.40
codegen_flags: <defaults>
</compile_context>

<pallas_src>
import jax
import jax.numpy as jnp
from jax.experimental import pallas as pl
from jax.experimental.pallas import tpu as pltpu

B = 5                     # batch
D_IN = 100                # input features
D_HID = 200               # 100 + 100
D_CAT = 5 * D_HID         # 1000, width after stack+flatten (reference only)
N_HEADS = 3
D_HEADS = N_HEADS * D_HID         # 600
D_HEADS_PAD = 640                 # 600 padded up to a multiple of 128


def _fused_kernel(x_ref, w0_ref, b0_ref, wh_ref, bh_ref, o_ref):
    # First linear: (B, D_IN) @ (D_IN, D_HID) + (1, D_HID)
    y = jnp.dot(x_ref[...], w0_ref[...],
                preferred_element_type=jnp.float32) + b0_ref[...]
    # Fused heads with replication folded into the weights:
    # (B, D_HID) @ (D_HID, D_HEADS_PAD) + (1, D_HEADS_PAD)
    o_ref[...] = jnp.dot(y, wh_ref[...],
                         preferred_element_type=jnp.float32) + bh_ref[...]


def _prepare_head_params(params):
    """Fold the 5x replication into each head weight and fuse the 3 heads.

    params["w{1,2,3}"] are (D_CAT, D_HID) = (1000, 200) pre-transposed weights,
    params["b{1,2,3}"] are (1, D_HID).
    Returns wh: (D_HID, D_HEADS_PAD), bh: (1, D_HEADS_PAD), zero-padded.
    """
    def reduce_head(w):
        # concat([y]*5, axis=1) @ w == y @ sum of the five (200, 200) row-blocks
        return w.reshape(5, D_HID, D_HID).sum(axis=0)

    wh = jnp.concatenate([reduce_head(params["w1"]),
                          reduce_head(params["w2"]),
                          reduce_head(params["w3"])], axis=1)          # (200, 600)
    bh = jnp.concatenate([params["b1"], params["b2"], params["b3"]],
                         axis=1)                                        # (1, 600)
    pad = D_HEADS_PAD - D_HEADS
    wh = jnp.pad(wh, ((0, 0), (0, pad)))                                # (200, 640)
    bh = jnp.pad(bh, ((0, 0), (0, pad)))                                # (1, 640)
    return wh, bh


def model_forward(x, params):
    """params = dict with w0,b0,w1,b1,w2,b2,w3,b3 (weights already transposed
    to (in_features, out_features); biases as (1, out_features))."""
    wh, bh = _prepare_head_params(params)

    vmem = pl.BlockSpec(memory_space=pltpu.MemorySpace.VMEM)
    flops = 2 * B * D_IN * D_HID + 2 * B * D_HID * D_HEADS_PAD
    bytes_accessed = 4 * (x.size + params["w0"].size + params["b0"].size
                          + wh.size + bh.size + B * D_HEADS_PAD)
    out = pl.pallas_call(
        _fused_kernel,
        out_shape=jax.ShapeDtypeStruct((B, D_HEADS_PAD), jnp.float32),
        in_specs=[vmem] * 5,
        out_specs=vmem,
        cost_estimate=pl.CostEstimate(flops=flops, transcendentals=0,
                                      bytes_accessed=bytes_accessed),
    )(x, params["w0"], params["b0"], wh, bh)

    # Split the fused, padded output slab into the three heads (free slicing).
    return (out[:, 0 * D_HID:1 * D_HID],
            out[:, 1 * D_HID:2 * D_HID],
            out[:, 2 * D_HID:3 * D_HID])


def _init_linear(key, fan_in, fan_out):
    # Deterministic init (PyTorch-style uniform(-1/sqrt(fan_in), 1/sqrt(fan_in))).
    kw, kb = jax.random.split(key)
    bound = 1.0 / jnp.sqrt(jnp.float32(fan_in))
    w = jax.random.uniform(kw, (fan_out, fan_in), jnp.float32, -bound, bound)
    b = jax.random.uniform(kb, (fan_out,), jnp.float32, -bound, bound)
    # kernel consumes W^T (in, out) and bias as (1, out)
    return w.T, b.reshape(1, fan_out)


def reference_forward(x, params):
    """Plain-JAX reference that mirrors the original forward (no folding)."""
    y = x @ params["w0"] + params["b0"]
    x2 = jnp.concatenate([y] * 5, axis=1)
    return (x2 @ params["w1"] + params["b1"],
            x2 @ params["w2"] + params["b2"],
            x2 @ params["w3"] + params["b3"])


if __name__ == "__main__":
    key = jax.random.PRNGKey(0)
    k_x, k0, k1, k2, k3 = jax.random.split(key, 5)

    x = jax.random.normal(k_x, (B, D_IN), jnp.float32)

    w0, b0 = _init_linear(k0, D_IN, D_HID)
    w1, b1 = _init_linear(k1, D_CAT, D_HID)
    w2, b2 = _init_linear(k2, D_CAT, D_HID)
    w3, b3 = _init_linear(k3, D_CAT, D_HID)
    params = dict(w0=w0, b0=b0, w1=w1, b1=b1, w2=w2, b2=b2, w3=w3, b3=b3)

    out = model_forward(x, params)
    out = jax.block_until_ready(out)

    ref = reference_forward(x, params)
    for o, r in zip(out, ref):
        assert o.shape == (B, D_HID), o.shape
        assert jnp.allclose(o, r, atol=1e-4, rtol=1e-4)

    print("KERNEL_OK")
</pallas_src>

<mosaic_0001>
module attributes {stable_mosaic.version = 11 : i64} {
  func.func @_fused_kernel(%arg0: memref<5x100xf32, #tpu.memory_space<vmem>>, %arg1: memref<100x200xf32, #tpu.memory_space<vmem>>, %arg2: memref<1x200xf32, #tpu.memory_space<vmem>>, %arg3: memref<200x640xf32, #tpu.memory_space<vmem>>, %arg4: memref<1x640xf32, #tpu.memory_space<vmem>>, %arg5: memref<5x640xf32, #tpu.memory_space<vmem>>) attributes {dimension_semantics = [], scalar_prefetch = 0 : i64, scratch_operands = 0 : i64, tpu.core_type = #tpu.core_type<tc>} {
    %c0 = arith.constant 0 : index
    %c0_0 = arith.constant 0 : index
    %0 = vector.load %arg0[%c0, %c0_0] : memref<5x100xf32, #tpu.memory_space<vmem>>, vector<5x100xf32>
    %c0_1 = arith.constant 0 : index
    %c0_2 = arith.constant 0 : index
    %1 = vector.load %arg1[%c0_1, %c0_2] : memref<100x200xf32, #tpu.memory_space<vmem>>, vector<100x200xf32>
    %cst = arith.constant dense<0.000000e+00> : vector<5x200xf32>
    %2 = tpu.matmul %0, %1, %cst {dimension_numbers = #tpu.dot_dimension_numbers<[1], [0], [0], [1], [0, 0, 1, 1], [], []>} : vector<5x100xf32>, vector<100x200xf32>, vector<5x200xf32> -> vector<5x200xf32>
    %c0_3 = arith.constant 0 : index
    %c0_4 = arith.constant 0 : index
    %3 = vector.load %arg2[%c0_3, %c0_4] : memref<1x200xf32, #tpu.memory_space<vmem>>, vector<1x200xf32>
    %4 = vector.broadcast %3 : vector<1x200xf32> to vector<5x200xf32>
    %5 = arith.addf %2, %4 : vector<5x200xf32>
    %c0_5 = arith.constant 0 : index
    %c0_6 = arith.constant 0 : index
    %6 = vector.load %arg3[%c0_5, %c0_6] : memref<200x640xf32, #tpu.memory_space<vmem>>, vector<200x640xf32>
    %cst_7 = arith.constant dense<0.000000e+00> : vector<5x640xf32>
    %7 = tpu.matmul %5, %6, %cst_7 {dimension_numbers = #tpu.dot_dimension_numbers<[1], [0], [0], [1], [0, 0, 1, 1], [], []>} : vector<5x200xf32>, vector<200x640xf32>, vector<5x640xf32> -> vector<5x640xf32>
    %c0_8 = arith.constant 0 : index
    %c0_9 = arith.constant 0 : index
    %8 = vector.load %arg4[%c0_8, %c0_9] : memref<1x640xf32, #tpu.memory_space<vmem>>, vector<1x640xf32>
    %9 = vector.broadcast %8 : vector<1x640xf32> to vector<5x640xf32>
    %10 = arith.addf %7, %9 : vector<5x640xf32>
    %c0_10 = arith.constant 0 : index
    %c0_11 = arith.constant 0 : index
    %11 = vector.load %arg5[%c0_10, %c0_11] : memref<5x640xf32, #tpu.memory_space<vmem>>, vector<5x640xf32>
    tpu.vector_store %arg5[%c0_10, %c0_11], %10 {strides = array<i32>} : memref<5x640xf32, #tpu.memory_space<vmem>>, vector<5x640xf32>,
    return
  }
}

</mosaic_0001>

<llo_original>
// kernel: tpu_custom_call.1
$region0: #{tpu_custom_call.1}
  #allocation0 [shape = 'u32[]', space=smem, size = 0x4, offset = 0x4, fixed_abs, tag = 'smem constant byte address 0x4 - core index']
  #allocation1 [shape = 'u32[144,128]{1,0:T(1,128)}', space=vmem, size = 0x12000, scoped, tag = 'internal scratch']
  %s0 = inlined_call_operand.vmem [shape: f32[5,100], index: 0, kind: input, shape index: {}]
  %s1 = inlined_call_operand.vmem [shape: f32[100,200], index: 1, kind: input, shape index: {}]
  %s2 = inlined_call_operand.vmem [shape: f32[1,200], index: 2, kind: input, shape index: {}]
  %s3 = inlined_call_operand.hbm [shape: f32[200,640], index: 3, kind: input, shape index: {}]
  %s4 = inlined_call_operand.vmem [shape: f32[1,640], index: 4, kind: input, shape index: {}]
  %s5 = inlined_call_operand.hbm [shape: f32[5,640], index: 5, kind: output, shape index: {}]
  %s6 = sld [smem:[#allocation0]]
  $region34: #{tpu_custom_call.1} parent=0
    _
  %s8 = ssub.s32 1, %s6
  %s9 = scalar_select 0, %s8, %s6
  $region1: #{tpu_custom_call.1} parent=0
    #allocation2 [shape = 'u8[512000]{0}', space=vmem, size = 0x7d000, scoped, tag = 'input window, operand 3, single buffered']
    #allocation3 [shape = 's32[1]{0}', space=sflag, size = 0x4, scoped, tag = 'scoped memory for tpu_custom_call.1']
    #allocation4 [shape = 's32[1]{0}', space=sflag, size = 0x4, scoped, tag = 'scoped memory for tpu_custom_call.1']
    #allocation5 [shape = 'u8[20480]{0}', space=vmem, size = 0x5000, scoped, tag = 'output window, operand 0, single buffered']
    %10 = vsyncpa [#allocation3], 0
    %11 = vsyncpa [#allocation4], 0
    // Predicated region
    $region2: #{tpu_custom_call.1} parent=1 // pred_check
      _
    $region3: #{tpu_custom_call.1} parent=1 // pred_check_branch
      %13 = sbr.rel (0) target = $region5
    $region4: #{tpu_custom_call.1} parent=1 // pred_region
      _
    $region5: #{tpu_custom_call.1} parent=1 // pred_fallthru
      _
    // Predicated region
    $region6: #{tpu_custom_call.1} parent=1 // pred_check
      _
    $region7: #{tpu_custom_call.1} parent=1 // pred_check_branch
      %15 = sbr.rel (0) target = $region9
    $region8: #{tpu_custom_call.1} parent=1 // pred_region
      _
    $region9: #{tpu_custom_call.1} parent=1 // pred_fallthru
      _
    // Predicated region
    $region10: #{tpu_custom_call.1} parent=1 // pred_check
      _
    $region11: #{tpu_custom_call.1} parent=1 // pred_check_branch
      %17 = sbr.rel (0) target = $region13
    $region12: #{tpu_custom_call.1} parent=1 // pred_region
      _
    $region13: #{tpu_custom_call.1} parent=1 // pred_fallthru
      _
    // Predicated region
    $region14: #{tpu_custom_call.1} parent=1 // pred_check
      _
    $region15: #{tpu_custom_call.1} parent=1 // pred_check_branch
      %19 = sbr.rel (0) target = $region17
    $region16: #{tpu_custom_call.1} parent=1 // pred_region
      %s21 = ssub.s32 16000, 16000
      %22 = vsyncadd [#allocation3], %s21
      %s23 = sshll.u32 [#allocation2], 4
      %s24 = int_to_ptr.vmem [resolvable:$true] %s23
      %29 = dma.hbm_to_vmem [thread:$0]  %s3, 16000, %s24, [#allocation3], 640, 640, 40
    $region17: #{tpu_custom_call.1} parent=1 // pred_fallthru
      _
    // Predicated region
    $region18: #{tpu_custom_call.1} parent=1 // pred_check
      _
    $region19: #{tpu_custom_call.1} parent=1 // pred_check_branch
      %31 = sbr.rel (0) target = $region21
    $region20: #{tpu_custom_call.1} parent=1 // pred_region
      _
    $region21: #{tpu_custom_call.1} parent=1 // pred_fallthru
      _
    // Predicated region
    $region22: #{tpu_custom_call.1} parent=1 // pred_check
      _
    $region23: #{tpu_custom_call.1} parent=1 // pred_check_branch
      %33 = sbr.rel (0) target = $region25
    $region24: #{tpu_custom_call.1} parent=1 // pred_region
      %34 = dma.done [#allocation3], 16000
    $region25: #{tpu_custom_call.1} parent=1 // pred_fallthru
      _
    %v35 = vld [vmem:[%s0] sm:$0x1f]
    %v36 = vld [vmem:[%s1] sm:$0xff]
    %v37 = vld [vmem:[%s1 + $0x8] sm:$0xff]
    %v38 = vld [vmem:[%s1 + $0x10] sm:$0xff]
    %v39 = vld [vmem:[%s1 + $0x18] sm:$0xff]
    %v40 = vld [vmem:[%s1 + $0x20] sm:$0xff]
    %v41 = vld [vmem:[%s1 + $0x28] sm:$0xff]
    %v42 = vld [vmem:[%s1 + $0x30] sm:$0xff]
    %v43 = vld [vmem:[%s1 + $0x38] sm:$0xff]
    %v44 = vld [vmem:[%s1 + $0x40] sm:$0xff]
    %v45 = vld [vmem:[%s1 + $0x48] sm:$0xff]
    %v46 = vld [vmem:[%s1 + $0x50] sm:$0xff]
    %v47 = vld [vmem:[%s1 + $0x58] sm:$0xff]
    %v48 = vld [vmem:[%s1 + $0x60] sm:$0xff]
    %v49 = vld [vmem:[%s1 + $0x68] sm:$0xff]
    %v50 = vld [vmem:[%s1 + $0x70] sm:$0xff]
    %v51 = vld [vmem:[%s1 + $0x78] sm:$0xff]
    %v52 = vld [vmem:[%s1 + $0x80] sm:$0xff]
    %v53 = vld [vmem:[%s1 + $0x88] sm:$0xff]
    %v54 = vld [vmem:[%s1 + $0x90] sm:$0xff]
    %v55 = vld [vmem:[%s1 + $0x98] sm:$0xff]
    %v56 = vld [vmem:[%s1 + $0xa0] sm:$0xff]
    %v57 = vld [vmem:[%s1 + $0xa8] sm:$0xff]
    %v58 = vld [vmem:[%s1 + $0xb0] sm:$0xff]
    %v59 = vld [vmem:[%s1 + $0xb8] sm:$0xff]
    %v60 = vld [vmem:[%s1 + $0xc0] sm:$0xf]
    %v61 = vld [vmem:[%s1 + $0xc8] sm:$0xf]
    %v62 = vld [vmem:[%s2] sm:$0x3]
    %v64 = vlaneseq
    %v65 = vshrl.u32 %v64, 7
    %v66 = vsub.s32 0, %v65
    %v67 = vrot.slane %v62, %v66
    %v68 = vlaneseq
    %v69 = vshrl.u32 %v68, 7
    %v70 = vsub.s32 1, %v69
    %v71 = vrot.slane %v62, %v70
    %vm74 = vcmask 818176
    %v76 = vsel %vm74, %v35, 0
    %vm78 = vcmask 1043456
    %v80 = vsel %vm78, %v60, 0
    %v83 = vsel %vm78, %v61, 0
    %85 = vmatprep.subr.mxu0 %v37
    %86 = vmatpush1.msra.mxu0 %v36
    %87 = vmatprep.subr.mxu0 %v39
    %88 = vmatpush1.msra.mxu0 %v38
    %89 = vmatprep.subr.mxu0 %v41
    %90 = vmatpush1.msra.mxu0 %v40
    %91 = vmatprep.subr.mxu0 %v43
    %92 = vmatpush1.msra.mxu0 %v42
    %93 = vmatprep.subr.mxu0 %v45
    %94 = vmatpush1.msra.mxu0 %v44
    %95 = vmatprep.subr.mxu0 %v47
    %96 = vmatpush1.msra.mxu0 %v46
    %97 = vmatprep.subr.mxu0 %v49
    %98 = vmatpush1.msra.mxu0 %v48
    %99 = vmatprep.subr.mxu0 %v51
    %100 = vmatpush1.msra.mxu0 %v50
    %101 = vmatprep.subr.mxu0 %v53
    %102 = vmatpush1.msra.mxu0 %v52
    %103 = vmatprep.subr.mxu0 %v55
    %104 = vmatpush1.msra.mxu0 %v54
    %105 = vmatprep.subr.mxu0 %v57
    %106 = vmatpush1.msra.mxu0 %v56
    %107 = vmatprep.subr.mxu0 %v59
    %108 = vmatpush1.msra.mxu0 %v58
    %109 = vmatprep.subr.mxu0 %v83
    %110 = vmatpush1.msra.mxu0 %v80
    %111 = vmatprep.subr.mxu0 0.0
    %112 = vmatpush1.msra.mxu0 0.0
    %113 = vmatprep.subr.mxu0 0.0
    %114 = vmatpush1.msra.mxu0 0.0
    %115 = vmatprep.subr.mxu0 0.0
    %116 = vmatpush1.msra.mxu0 0.0
    %117 = vmatprep.subr.mxu0 0.0
    %118 = vmatpush1.msra.mxu0 0.0
    %119 = vmatprep.subr.mxu0 0.0
    %120 = vmatpush1.msra.mxu0 0.0
    %121 = vmatprep.subr.mxu0 0.0
    %122 = vmatpush1.msra.mxu0 0.0
    %123 = vmatprep.subr.mxu0 0.0
    %124 = vmatpush1.msra.mxu0 0.0
    %125 = vmatprep.subr.mxu0 0.0
    %126 = vmatpush1.msra.mxu0 0.0
    %127 = vmatprep.subr.mxu0 0.0
    %128 = vmatpush1.msra.mxu0 0.0
    %129 = vmatprep.subr.mxu0 0.0
    %130 = vmatpush1.msra.mxu0 0.0
    %131 = vmatprep.subr.mxu0 0.0
    %132 = vmatpush1.msra.mxu0 0.0
    %133 = vmatprep.subr.mxu0 0.0
    %134 = vmatpush1.msra.mxu0 0.0
    %135 = vmatprep.subr.mxu0 0.0
    %136 = vmatpush1.msra.mxu0 0.0
    %137 = vmatprep.subr.mxu0 0.0
    %138 = vmatpush1.msra.mxu0 0.0
    %139 = vmatprep.subr.mxu0 0.0
    %140 = vmatpush1.msra.mxu0 0.0
    %141 = vmatprep.subr.mxu0 0.0
    %142 = vmatpush1.msra.mxu0 0.0
    %143 = vmatprep.subr.mxu0 0.0
    %144 = vmatpush1.msra.mxu0 0.0
    %145 = vmatprep.subr.mxu0 0.0
    %146 = vmatpush1.msra.mxu0 0.0
    %147 = vmatprep.subr.mxu0 0.0
    %148 = vmatpush1.msra.mxu0 0.0
    %149 = vmatprep.mubr.f32.mxu0 0.0
    %150 = vmatmul.mubr.f32.gmra.mrb[0].mxu0 %v76
    %v151 = vpop.f32.mrb[0].mxu0
    %v152 = vadd.f32 %v67, %v151
    %v153 = vpop.f32.mrb[0].mxu0
    %v154 = vadd.f32 %v71, %v153
    %155 = vdwg.mxu0
    %v156 = vld [vmem:[#allocation2] sm:$0xff]
    %v157 = vld [vmem:[#allocation2 + $0x8] sm:$0xff]
    %v158 = vld [vmem:[#allocation2 + $0x10] sm:$0xff]
    %v159 = vld [vmem:[#allocation2 + $0x18] sm:$0xff]
    %v160 = vld [vmem:[#allocation2 + $0x20] sm:$0xff]
    %v161 = vld [vmem:[#allocation2 + $0x28] sm:$0xff]
    %v162 = vld [vmem:[#allocation2 + $0x30] sm:$0xff]
    %v163 = vld [vmem:[#allocation2 + $0x38] sm:$0xff]
    %v164 = vld [vmem:[#allocation2 + $0x40] sm:$0xff]
    %v165 = vld [vmem:[#allocation2 + $0x48] sm:$0xff]
    %v166 = vld [vmem:[#allocation2 + $0x50] sm:$0xff]
    %v167 = vld [vmem:[#allocation2 + $0x58] sm:$0xff]
    %v168 = vld [vmem:[#allocation2 + $0x60] sm:$0xff]
    %v169 = vld [vmem:[#allocation2 + $0x68] sm:$0xff]
    %v170 = vld [vmem:[#allocation2 + $0x70] sm:$0xff]
    %v171 = vld [vmem:[#allocation2 + $0x78] sm:$0xff]
    %v172 = vld [vmem:[#allocation2 + $0x80] sm:$0xff]
    %v173 = vld [vmem:[#allocation2 + $0x88] sm:$0xff]
    %v174 = vld [vmem:[#allocation2 + $0x90] sm:$0xff]
    %v175 = vld [vmem:[#allocation2 + $0x98] sm:$0xff]
    %v176 = vld [vmem:[#allocation2 + $0xa0] sm:$0xff]
    %v177 = vld [vmem:[#allocation2 + $0xa8] sm:$0xff]
    %v178 = vld [vmem:[#allocation2 + $0xb0] sm:$0xff]
    %v179 = vld [vmem:[#allocation2 + $0xb8] sm:$0xff]
    %v180 = vld [vmem:[#allocation2 + $0xc0] sm:$0xff]
    %v181 = vld [vmem:[#allocation2 + $0xc8] sm:$0xff]
    %v182 = vld [vmem:[#allocation2 + $0xd0] sm:$0xff]
    %v183 = vld [vmem:[#allocation2 + $0xd8] sm:$0xff]
    %v184 = vld [vmem:[#allocation2 + $0xe0] sm:$0xff]
    %v185 = vld [vmem:[#allocation2 + $0xe8] sm:$0xff]
    %v186 = vld [vmem:[#allocation2 + $0xf0] sm:$0xff]
    %v187 = vld [vmem:[#allocation2 + $0xf8] sm:$0xff]
    %v188 = vld [vmem:[#allocation2 + $0x100] sm:$0xff]
    %v189 = vld [vmem:[#allocation2 + $0x108] sm:$0xff]
    %v190 = vld [vmem:[#allocation2 + $0x110] sm:$0xff]
    %v191 = vld [vmem:[#allocation2 + $0x118] sm:$0xff]
    %v192 = vld [vmem:[#allocation2 + $0x120] sm:$0xff]
    %v193 = vld [vmem:[#allocation2 + $0x128] sm:$0xff]
    %v194 = vld [vmem:[#allocation2 + $0x130] sm:$0xff]
    %v195 = vld [vmem:[#allocation2 + $0x138] sm:$0xff]
    %v196 = vld [vmem:[#allocation2 + $0x140] sm:$0xff]
    %v197 = vld [vmem:[#allocation2 + $0x148] sm:$0xff]
    %v198 = vld [vmem:[#allocation2 + $0x150] sm:$0xff]
    %v199 = vld [vmem:[#allocation2 + $0x158] sm:$0xff]
    %v200 = vld [vmem:[#allocation2 + $0x160] sm:$0xff]
    %v201 = vld [vmem:[#allocation2 + $0x168] sm:$0xff]
    %v202 = vld [vmem:[#allocation2 + $0x170] sm:$0xff]
    %v203 = vld [vmem:[#allocation2 + $0x178] sm:$0xff]
    %v204 = vld [vmem:[#allocation2 + $0x180] sm:$0xff]
    %v205 = vld [vmem:[#allocation2 + $0x188] sm:$0xff]
    %v206 = vld [vmem:[#allocation2 + $0x190] sm:$0xff]
    %v207 = vld [vmem:[#allocation2 + $0x198] sm:$0xff]
    %v208 = vld [vmem:[#allocation2 + $0x1a0] sm:$0xff]
    %v209 = vld [vmem:[#allocation2 + $0x1a8] sm:$0xff]
    %v210 = vld [vmem:[#allocation2 + $0x1b0] sm:$0xff]
    %v211 = vld [vmem:[#allocation2 + $0x1b8] sm:$0xff]
    %v212 = vld [vmem:[#allocation2 + $0x1c0] sm:$0xff]
    %v213 = vld [vmem:[#allocation2 + $0x1c8] sm:$0xff]
    %v214 = vld [vmem:[#allocation2 + $0x1d0] sm:$0xff]
    %v215 = vld [vmem:[#allocation2 + $0x1d8] sm:$0xff]
    %v216 = vld [vmem:[#allocation2 + $0x1e0] sm:$0xff]
    %v217 = vld [vmem:[#allocation2 + $0x1e8] sm:$0xff]
    %v218 = vld [vmem:[#allocation2 + $0x1f0] sm:$0xff]
    %v219 = vld [vmem:[#allocation2 + $0x1f8] sm:$0xff]
    %v220 = vld [vmem:[#allocation2 + $0x200] sm:$0xff]
    %v221 = vld [vmem:[#allocation2 + $0x208] sm:$0xff]
    %v222 = vld [vmem:[#allocation2 + $0x210] sm:$0xff]
    %v223 = vld [vmem:[#allocation2 + $0x218] sm:$0xff]
    %v224 = vld [vmem:[#allocation2 + $0x220] sm:$0xff]
    %v225 = vld [vmem:[#allocation2 + $0x228] sm:$0xff]
    %v226 = vld [vmem:[#allocation2 + $0x230] sm:$0xff]
    %v227 = vld [vmem:[#allocation2 + $0x238] sm:$0xff]
    %v228 = vld [vmem:[#allocation2 + $0x240] sm:$0xff]
    %v229 = vld [vmem:[#allocation2 + $0x248] sm:$0xff]
    %v230 = vld [vmem:[#allocation2 + $0x250] sm:$0xff]
    %v231 = vld [vmem:[#allocation2 + $0x258] sm:$0xff]
    %v232 = vld [vmem:[#allocation2 + $0x260] sm:$0xff]
    %v233 = vld [vmem:[#allocation2 + $0x268] sm:$0xff]
    %v234 = vld [vmem:[#allocation2 + $0x270] sm:$0xff]
    %v235 = vld [vmem:[#allocation2 + $0x278] sm:$0xff]
    %v236 = vld [vmem:[#allocation2 + $0x280] sm:$0xff]
    %v237 = vld [vmem:[#allocation2 + $0x288] sm:$0xff]
    %v238 = vld [vmem:[#allocation2 + $0x290] sm:$0xff]
    %v239 = vld [vmem:[#allocation2 + $0x298] sm:$0xff]
    %v240 = vld [vmem:[#allocation2 + $0x2a0] sm:$0xff]
    %v241 = vld [vmem:[#allocation2 + $0x2a8] sm:$0xff]
    %v242 = vld [vmem:[#allocation2 + $0x2b0] sm:$0xff]
    %v243 = vld [vmem:[#allocation2 + $0x2b8] sm:$0xff]
    %v244 = vld [vmem:[#allocation2 + $0x2c0] sm:$0xff]
    %v245 = vld [vmem:[#allocation2 + $0x2c8] sm:$0xff]
    %v246 = vld [vmem:[#allocation2 + $0x2d0] sm:$0xff]
    %v247 = vld [vmem:[#allocation2 + $0x2d8] sm:$0xff]
    %v248 = vld [vmem:[#allocation2 + $0x2e0] sm:$0xff]
    %v249 = vld [vmem:[#allocation2 + $0x2e8] sm:$0xff]
    %v250 = vld [vmem:[#allocation2 + $0x2f0] sm:$0xff]
    %v251 = vld [vmem:[#allocation2 + $0x2f8] sm:$0xff]
    %v252 = vld [vmem:[#allocation2 + $0x300] sm:$0xff]
    %v253 = vld [vmem:[#allocation2 + $0x308] sm:$0xff]
    %v254 = vld [vmem:[#allocation2 + $0x310] sm:$0xff]
    %v255 = vld [vmem:[#allocation2 + $0x318] sm:$0xff]
    %v256 = vld [vmem:[#allocation2 + $0x320] sm:$0xff]
    %v257 = vld [vmem:[#allocation2 + $0x328] sm:$0xff]
    %v258 = vld [vmem:[#allocation2 + $0x330] sm:$0xff]
    %v259 = vld [vmem:[#allocation2 + $0x338] sm:$0xff]
    %v260 = vld [vmem:[#allocation2 + $0x340] sm:$0xff]
    %v261 = vld [vmem:[#allocation2 + $0x348] sm:$0xff]
    %v262 = vld [vmem:[#allocation2 + $0x350] sm:$0xff]
    %v263 = vld [vmem:[#allocation2 + $0x358] sm:$0xff]
    %v264 = vld [vmem:[#allocation2 + $0x360] sm:$0xff]
    %v265 = vld [vmem:[#allocation2 + $0x368] sm:$0xff]
    %v266 = vld [vmem:[#allocation2 + $0x370] sm:$0xff]
    %v267 = vld [vmem:[#allocation2 + $0x378] sm:$0xff]
    %v268 = vld [vmem:[#allocation2 + $0x380] sm:$0xff]
    %v269 = vld [vmem:[#allocation2 + $0x388] sm:$0xff]
    %v270 = vld [vmem:[#allocation2 + $0x390] sm:$0xff]
    %v271 = vld [vmem:[#allocation2 + $0x398] sm:$0xff]
    %v272 = vld [vmem:[#allocation2 + $0x3a0] sm:$0xff]
    %v273 = vld [vmem:[#allocation2 + $0x3a8] sm:$0xff]
    %v274 = vld [vmem:[#allocation2 + $0x3b0] sm:$0xff]
    %v275 = vld [vmem:[#allocation2 + $0x3b8] sm:$0xff]
    %v276 = vld [vmem:[#allocation2 + $0x3c0] sm:$0xff]
    %v277 = vld [vmem:[#allocation2 + $0x3c8] sm:$0xff]
    %v278 = vld [vmem:[#allocation2 + $0x3d0] sm:$0xff]
    %v279 = vld [vmem:[#allocation2 + $0x3d8] sm:$0xff]
    %v280 = vld [vmem:[#allocation2 + $0x3e0] sm:$0xff]
    %v281 = vld [vmem:[%s4] sm:$0x1f]
    %v283 = vlaneseq
    %v284 = vshrl.u32 %v283, 7
    %v285 = vsub.s32 0, %v284
    %v286 = vrot.slane %v281, %v285
    %v287 = vlaneseq
    %v288 = vshrl.u32 %v287, 7
    %v289 = vsub.s32 1, %v288
    %v290 = vrot.slane %v281, %v289
    %v291 = vlaneseq
    %v292 = vshrl.u32 %v291, 7
    %v293 = vsub.s32 2, %v292
    %v294 = vrot.slane %v281, %v293
    %v295 = vlaneseq
    %v296 = vshrl.u32 %v295, 7
    %v297 = vsub.s32 3, %v296
    %v298 = vrot.slane %v281, %v297
    %v299 = vlaneseq
    %v300 = vshrl.u32 %v299, 7
    %v301 = vsub.s32 4, %v300
    %v302 = vrot.slane %v281, %v301
    %vm308 = vcmask 588800
    %v310 = vsel %vm308, %v154, 0
    %312 = vmatprep.subr.mxu0 %v157
    %313 = vmatpush1.msra.mxu0 %v156
    %314 = vmatprep.subr.mxu0 %v162
    %315 = vmatpush1.msra.mxu0 %v161
    %316 = vmatprep.subr.mxu0 %v167
    %317 = vmatpush1.msra.mxu0 %v166
    %318 = vmatprep.subr.mxu0 %v172
    %319 = vmatpush1.msra.mxu0 %v171
    %320 = vmatprep.subr.mxu0 %v177
    %321 = vmatpush1.msra.mxu0 %v176
    %322 = vmatprep.subr.mxu0 %v182
    %323 = vmatpush1.msra.mxu0 %v181
    %324 = vmatprep.subr.mxu0 %v187
    %325 = vmatpush1.msra.mxu0 %v186
    %326 = vmatprep.subr.mxu0 %v192
    %327 = vmatpush1.msra.mxu0 %v191
    %328 = vmatprep.subr.mxu0 %v197
    %329 = vmatpush1.msra.mxu0 %v196
    %330 = vmatprep.subr.mxu0 %v202
    %331 = vmatpush1.msra.mxu0 %v201
    %332 = vmatprep.subr.mxu0 %v207
    %333 = vmatpush1.msra.mxu0 %v206
    %334 = vmatprep.subr.mxu0 %v212
    %335 = vmatpush1.msra.mxu0 %v211
    %336 = vmatprep.subr.mxu0 %v217
    %337 = vmatpush1.msra.mxu0 %v216
    %338 = vmatprep.subr.mxu0 %v222
    %339 = vmatpush1.msra.mxu0 %v221
    %340 = vmatprep.subr.mxu0 %v227
    %341 = vmatpush1.msra.mxu0 %v226
    %342 = vmatprep.subr.mxu0 %v232
    %343 = vmatpush1.msra.mxu0 %v231
    %344 = vmatprep.subr.mxu0 %v237
    %345 = vmatpush1.msra.mxu0 %v236
    %346 = vmatprep.subr.mxu0 %v242
    %347 = vmatpush1.msra.mxu0 %v241
    %348 = vmatprep.subr.mxu0 %v247
    %349 = vmatpush1.msra.mxu0 %v246
    %350 = vmatprep.subr.mxu0 %v252
    %351 = vmatpush1.msra.mxu0 %v251
    %352 = vmatprep.subr.mxu0 %v257
    %353 = vmatpush1.msra.mxu0 %v256
    %354 = vmatprep.subr.mxu0 %v262
    %355 = vmatpush1.msra.mxu0 %v261
    %356 = vmatprep.subr.mxu0 %v267
    %357 = vmatpush1.msra.mxu0 %v266
    %358 = vmatprep.subr.mxu0 %v272
    %359 = vmatpush1.msra.mxu0 %v271
    %360 = vmatprep.subr.mxu0 %v277
    %361 = vmatpush1.msra.mxu0 %v276
    %362 = vmatprep.subr.mxu0 0.0
    %363 = vmatpush1.msra.mxu0 0.0
    %364 = vmatprep.subr.mxu0 0.0
    %365 = vmatpush1.msra.mxu0 0.0
    %366 = vmatprep.subr.mxu0 0.0
    %367 = vmatpush1.msra.mxu0 0.0
    %368 = vmatprep.subr.mxu0 0.0
    %369 = vmatpush1.msra.mxu0 0.0
    %370 = vmatprep.subr.mxu0 0.0
    %371 = vmatpush1.msra.mxu0 0.0
    %372 = vmatprep.subr.mxu0 0.0
    %373 = vmatpush1.msra.mxu0 0.0
    %374 = vmatprep.subr.mxu0 0.0
    %375 = vmatpush1.msra.mxu0 0.0
    %376 = vmatprep.mubr.f32.mxu0 %v310
    %377 = vmatmul.mubr.f32.gmra.mrb[0].mxu0 %v152
    %v378 = vpop.f32.mrb[0].mxu0
    %v379 = vadd.f32 %v286, %v378
    %v380 = vpop.f32.mrb[0].mxu0
    %v381 = vadd.f32 %v290, %v380
    %382 = vdwg.mxu0
    %383 = vmatprep.subr.mxu0 %v159
    %384 = vmatpush1.msra.mxu0 %v158
    %385 = vmatprep.subr.mxu0 %v164
    %386 = vmatpush1.msra.mxu0 %v163
    %387 = vmatprep.subr.mxu0 %v169
    %388 = vmatpush1.msra.mxu0 %v168
    %389 = vmatprep.subr.mxu0 %v174
    %390 = vmatpush1.msra.mxu0 %v173
    %391 = vmatprep.subr.mxu0 %v179
    %392 = vmatpush1.msra.mxu0 %v178
    %393 = vmatprep.subr.mxu0 %v184
    %394 = vmatpush1.msra.mxu0 %v183
    %395 = vmatprep.subr.mxu0 %v189
    %396 = vmatpush1.msra.mxu0 %v188
    %397 = vmatprep.subr.mxu0 %v194
    %398 = vmatpush1.msra.mxu0 %v193
    %399 = vmatprep.subr.mxu0 %v199
    %400 = vmatpush1.msra.mxu0 %v198
    %401 = vmatprep.subr.mxu0 %v204
    %402 = vmatpush1.msra.mxu0 %v203
    %403 = vmatprep.subr.mxu0 %v209
    %404 = vmatpush1.msra.mxu0 %v208
    %405 = vmatprep.subr.mxu0 %v214
    %406 = vmatpush1.msra.mxu0 %v213
    %407 = vmatprep.subr.mxu0 %v219
    %408 = vmatpush1.msra.mxu0 %v218
    %409 = vmatprep.subr.mxu0 %v224
    %410 = vmatpush1.msra.mxu0 %v223
    %411 = vmatprep.subr.mxu0 %v229
    %412 = vmatpush1.msra.mxu0 %v228
    %413 = vmatprep.subr.mxu0 %v234
    %414 = vmatpush1.msra.mxu0 %v233
    %415 = vmatprep.subr.mxu0 %v239
    %416 = vmatpush1.msra.mxu0 %v238
    %417 = vmatprep.subr.mxu0 %v244
    %418 = vmatpush1.msra.mxu0 %v243
    %419 = vmatprep.subr.mxu0 %v249
    %420 = vmatpush1.msra.mxu0 %v248
    %421 = vmatprep.subr.mxu0 %v254
    %422 = vmatpush1.msra.mxu0 %v253
    %423 = vmatprep.subr.mxu0 %v259
    %424 = vmatpush1.msra.mxu0 %v258
    %425 = vmatprep.subr.mxu0 %v264
    %426 = vmatpush1.msra.mxu0 %v263
    %427 = vmatprep.subr.mxu0 %v269
    %428 = vmatpush1.msra.mxu0 %v268
    %429 = vmatprep.subr.mxu0 %v274
    %430 = vmatpush1.msra.mxu0 %v273
    %431 = vmatprep.subr.mxu0 %v279
    %432 = vmatpush1.msra.mxu0 %v278
    %433 = vmatprep.subr.mxu0 0.0
    %434 = vmatpush1.msra.mxu0 0.0
    %435 = vmatprep.subr.mxu0 0.0
    %436 = vmatpush1.msra.mxu0 0.0
    %437 = vmatprep.subr.mxu0 0.0
    %438 = vmatpush1.msra.mxu0 0.0
    %439 = vmatprep.subr.mxu0 0.0
    %440 = vmatpush1.msra.mxu0 0.0
    %441 = vmatprep.subr.mxu0 0.0
    %442 = vmatpush1.msra.mxu0 0.0
    %443 = vmatprep.subr.mxu0 0.0
    %444 = vmatpush1.msra.mxu0 0.0
    %445 = vmatprep.subr.mxu0 0.0
    %446 = vmatpush1.msra.mxu0 0.0
    %447 = vmatprep.mubr.f32.mxu0 %v310
    %448 = vmatmul.mubr.f32.gmra.mrb[0].mxu0 %v152
    %v449 = vpop.f32.mrb[0].mxu0
    %v450 = vadd.f32 %v294, %v449
    %v451 = vpop.f32.mrb[0].mxu0
    %v452 = vadd.f32 %v298, %v451
    %453 = vdwg.mxu0
    %454 = vmatprep.subr.mxu0 0.0
    %455 = vmatpush1.msra.mxu0 %v160
    %456 = vmatprep.subr.mxu0 0.0
    %457 = vmatpush1.msra.mxu0 %v165
    %458 = vmatprep.subr.mxu0 0.0
    %459 = vmatpush1.msra.mxu0 %v170
    %460 = vmatprep.subr.mxu0 0.0
    %461 = vmatpush1.msra.mxu0 %v175
    %462 = vmatprep.subr.mxu0 0.0
    %463 = vmatpush1.msra.mxu0 %v180
    %464 = vmatprep.subr.mxu0 0.0
    %465 = vmatpush1.msra.mxu0 %v185
    %466 = vmatprep.subr.mxu0 0.0
    %467 = vmatpush1.msra.mxu0 %v190
    %468 = vmatprep.subr.mxu0 0.0
    %469 = vmatpush1.msra.mxu0 %v195
    %470 = vmatprep.subr.mxu0 0.0
    %471 = vmatpush1.msra.mxu0 %v200
    %472 = vmatprep.subr.mxu0 0.0
    %473 = vmatpush1.msra.mxu0 %v205
    %474 = vmatprep.subr.mxu0 0.0
    %475 = vmatpush1.msra.mxu0 %v210
    %476 = vmatprep.subr.mxu0 0.0
    %477 = vmatpush1.msra.mxu0 %v215
    %478 = vmatprep.subr.mxu0 0.0
    %479 = vmatpush1.msra.mxu0 %v220
    %480 = vmatprep.subr.mxu0 0.0
    %481 = vmatpush1.msra.mxu0 %v225
    %482 = vmatprep.subr.mxu0 0.0
    %483 = vmatpush1.msra.mxu0 %v230
    %484 = vmatprep.subr.mxu0 0.0
    %485 = vmatpush1.msra.mxu0 %v235
    %486 = vmatprep.subr.mxu0 0.0
    %487 = vmatpush1.msra.mxu0 %v240
    %488 = vmatprep.subr.mxu0 0.0
    %489 = vmatpush1.msra.mxu0 %v245
    %490 = vmatprep.subr.mxu0 0.0
    %491 = vmatpush1.msra.mxu0 %v250
    %492 = vmatprep.subr.mxu0 0.0
    %493 = vmatpush1.msra.mxu0 %v255
    %494 = vmatprep.subr.mxu0 0.0
    %495 = vmatpush1.msra.mxu0 %v260
    %496 = vmatprep.subr.mxu0 0.0
    %497 = vmatpush1.msra.mxu0 %v265
    %498 = vmatprep.subr.mxu0 0.0
    %499 = vmatpush1.msra.mxu0 %v270
    %500 = vmatprep.subr.mxu0 0.0
    %501 = vmatpush1.msra.mxu0 %v275
    %502 = vmatprep.subr.mxu0 0.0
    %503 = vmatpush1.msra.mxu0 %v280
    %504 = vmatprep.subr.mxu0 0.0
    %505 = vmatpush1.msra.mxu0 0.0
    %506 = vmatprep.subr.mxu0 0.0
    %507 = vmatpush1.msra.mxu0 0.0
    %508 = vmatprep.subr.mxu0 0.0
    %509 = vmatpush1.msra.mxu0 0.0
    %510 = vmatprep.subr.mxu0 0.0
    %511 = vmatpush1.msra.mxu0 0.0
    %512 = vmatprep.subr.mxu0 0.0
    %513 = vmatpush1.msra.mxu0 0.0
    %514 = vmatprep.subr.mxu0 0.0
    %515 = vmatpush1.msra.mxu0 0.0
    %516 = vmatprep.subr.mxu0 0.0
    %517 = vmatpush1.msra.mxu0 0.0
    %518 = vmatprep.mubr.f32.mxu0 %v310
    %519 = vmatmul.mubr.f32.gmra.mrb[0].mxu0 %v152
    %v520 = vpop.f32.mrb[0].mxu0
    %v521 = vadd.f32 %v302, %v520
    %v522 = vpop.f32.mrb[0].mxu0
    %523 = vdwg.mxu0
    %524 = vst [vmem:[#allocation5] sm:$0x1f] %v379
    %525 = vst [vmem:[#allocation5 + $0x8] sm:$0x1f] %v381
    %526 = vst [vmem:[#allocation5 + $0x10] sm:$0x1f] %v450
    %527 = vst [vmem:[#allocation5 + $0x18] sm:$0x1f] %v452
    %528 = vst [vmem:[#allocation5 + $0x20] sm:$0x1f] %v521
    // Predicated region
    $region26: #{tpu_custom_call.1} parent=1 // pred_check
      _
    $region27: #{tpu_custom_call.1} parent=1 // pred_check_branch
      %530 = sbr.rel (0) target = $region29
    $region28: #{tpu_custom_call.1} parent=1 // pred_region
      %s532 = ssub.s32 640, 640
      %533 = vsyncadd [#allocation4], %s532
      %s535 = sshll.u32 [#allocation5], 4
      %s536 = int_to_ptr.vmem [resolvable:$true] %s535
      %538 = dma.vmem_to_hbm [thread:$0]  %s536, 640, %s5, [#allocation4]
    $region29: #{tpu_custom_call.1} parent=1 // pred_fallthru
      _
    // Predicated region
    $region30: #{tpu_custom_call.1} parent=1 // pred_check
      _
    $region31: #{tpu_custom_call.1} parent=1 // pred_check_branch
      %540 = sbr.rel (0) target = $region33
    $region32: #{tpu_custom_call.1} parent=1 // pred_region
      %541 = dma.done [#allocation4], 640
    $region33: #{tpu_custom_call.1} parent=1 // pred_fallthru
      _
    %542 = vsyncpa [#allocation3], 1
    %543 = vsyncpa [#allocation4], 1

</llo_original>
